<compile_context>
chip_gen: v5e
topology: v5e:2x2
jax: 0.10.0
libtpu: 0.0.40
codegen_flags: <defaults>
</compile_context>

<pallas_src>
import functools

import jax
import jax.numpy as jnp
from jax.experimental import pallas as pl
from jax.experimental.pallas import tpu as pltpu


def _vmem_limit_bytes():
    """Generation-aware VMEM request: ~75% of physical, capped at 112 MiB."""
    phys = 64 * 1024 * 1024            # conservative default (v7x per-TC VMEM)
    try:
        info = pltpu.get_tpu_info()
        phys = int(getattr(info, "vmem_capacity_bytes", phys) or phys)
    except Exception:
        pass
    return min((phys * 3) // 4, 112 * 1024 * 1024)


def _conv_stats_kernel(ph00_ref, ph01_ref, ph10_ref, ph11_ref, w_ref, b_ref,
                       out_ref, stat_ref, *, ho, wo, cin, mm_dtype, fuse_k):
    """Per-image conv (9 taps) + bias + partial BN stats, all from one f32 acc."""
    # phase refs: (1, ho+1, wo+1, cin); phase (py, px) holds xpad[:, py::2, px::2, :]
    phases = (ph00_ref[0], ph01_ref[0], ph10_ref[0], ph11_ref[0])
    m_img = ho * wo

    def tap(ky, kx):
        # y[oy,ox] = sum_{ky,kx} xpad[2*oy+ky, 2*ox+kx] @ W[ky,kx]
        #   ky = 2*dy + py  ->  xpad[2*oy+ky] = phase[py][oy + dy]  (same for kx)
        py, dy = ky % 2, ky // 2
        px, dx = kx % 2, kx // 2
        return phases[2 * py + px][dy:dy + ho, dx:dx + wo, :]      # (ho, wo, cin)

    if fuse_k:
        # cin % 128 == 0: concat is lane-aligned -> one big MXU matmul (K = 9*cin)
        slab = jnp.concatenate(
            [tap(ky, kx) for ky in range(3) for kx in range(3)],
            axis=-1).reshape(m_img, 9 * cin)
        acc = jnp.dot(slab.astype(mm_dtype), w_ref[...],
                      preferred_element_type=jnp.float32)
    else:
        # small / unaligned cin: 9 per-tap matmuls accumulated in f32
        # (no lane concat / relayout, no zero-padded-K MXU passes)
        acc = None
        for ky in range(3):
            for kx in range(3):
                piece = tap(ky, kx).reshape(m_img, cin).astype(mm_dtype)
                contrib = jnp.dot(piece, w_ref[3 * ky + kx],
                                  preferred_element_type=jnp.float32)
                acc = contrib if acc is None else acc + contrib

    acc = acc + b_ref[...]                       # (m_img, cout_pad) f32
    out_ref[0] = acc.astype(out_ref.dtype)

    # single-pass partial BatchNorm statistics for this image (f32)
    # TODO(synk): move to a shifted / Welford-style combination if N*Ho*Wo gets
    # large enough for E[x^2]-E[x]^2 cancellation to matter.
    stat_ref[0] = jnp.concatenate(
        [jnp.sum(acc, axis=0, keepdims=True),
         jnp.sum(acc * acc, axis=0, keepdims=True)], axis=0)     # (2, cout_pad)


@functools.partial(jax.jit, static_argnames=("use_bf16",))
def downsample(x_nchw, weight_oihw, bias, gamma, beta, eps=1e-5, *,
               use_bf16=True):
    """Pallas equivalent of Downsample.forward (patch_size == 2)."""
    n, cin, h, wd = x_nchw.shape
    cout = weight_oihw.shape[0]
    # TODO(synk): odd H/W (allowed by Conv2d stride=2 pad=1) is unsupported here.
    assert h % 2 == 0 and wd % 2 == 0
    ho, wo = h // 2, wd // 2
    m_img = ho * wo
    m = n * m_img

    mm_dtype = jnp.bfloat16 if use_bf16 else jnp.float32
    out_dtype = jnp.bfloat16 if use_bf16 else jnp.float32   # HBM intermediate
    cout_pad = pl.cdiv(cout, 128) * 128
    fuse_k = (cin % 128 == 0)

    # ---- layout plumbing: NCHW -> NHWC, zero-pad, 2x2 phase views (no concat) ----
    # TODO(synk): for very large activations / tiny cin, replace with
    # memory_space=pl.ANY + strided DMA (lane packing) inside the kernel and
    # row-tile m_img with a 1-row halo so per-step VMEM stays bounded on v7x.
    x = jnp.transpose(x_nchw, (0, 2, 3, 1)).astype(mm_dtype)
    xp = jnp.pad(x, ((0, 0), (1, 1), (1, 1), (0, 0)))
    ph = [xp[:, py::2, px::2, :] for py in (0, 1) for px in (0, 1)]  # (n, ho+1, wo+1, cin)

    # weights: (Cout, Cin, 3, 3) -> tap-major layout, Cout zero-padded to lanes
    w = jnp.transpose(weight_oihw, (2, 3, 1, 0))            # (3, 3, cin, cout)
    if fuse_k:
        w = w.reshape(9 * cin, cout)
        w = jnp.pad(w, ((0, 0), (0, cout_pad - cout))).astype(mm_dtype)
        w_spec = pl.BlockSpec((9 * cin, cout_pad), lambda i: (0, 0))
    else:
        w = w.reshape(9, cin, cout)
        w = jnp.pad(w, ((0, 0), (0, 0), (0, cout_pad - cout))).astype(mm_dtype)
        w_spec = pl.BlockSpec((9, cin, cout_pad), lambda i: (0, 0, 0))
    b = jnp.pad(bias.astype(jnp.float32), (0, cout_pad - cout)).reshape(1, cout_pad)
    # TODO(synk): pipeline_mode=pl.Buffered(1) on w/b for large cin/cout stages
    # to reclaim the redundant second buffer of the resident operands (v7x).

    hp, wp = ho + 1, wo + 1
    kern = functools.partial(_conv_stats_kernel, ho=ho, wo=wo, cin=cin,
                             mm_dtype=mm_dtype, fuse_k=fuse_k)
    phase_spec = pl.BlockSpec((1, hp, wp, cin), lambda i: (i, 0, 0, 0))

    conv_out, stats = pl.pallas_call(
        kern,
        out_shape=(jax.ShapeDtypeStruct((n, m_img, cout_pad), out_dtype),
                   jax.ShapeDtypeStruct((n, 2, cout_pad), jnp.float32)),
        grid_spec=pltpu.PrefetchScalarGridSpec(
            num_scalar_prefetch=0,
            grid=(n,),
            in_specs=[phase_spec, phase_spec, phase_spec, phase_spec,
                      w_spec,
                      pl.BlockSpec((1, cout_pad), lambda i: (0, 0))],
            out_specs=(pl.BlockSpec((1, m_img, cout_pad), lambda i: (i, 0, 0)),
                       pl.BlockSpec((1, 2, cout_pad), lambda i: (i, 0, 0)))),
        compiler_params=pltpu.CompilerParams(
            dimension_semantics=("parallel",),
            vmem_limit_bytes=_vmem_limit_bytes()),
    )(ph[0], ph[1], ph[2], ph[3], w, b)

    # ---- fold global BN stats into per-channel scale/shift (f32, tiny) ----
    cnt = jnp.float32(m)
    ssum = jnp.sum(stats[:, 0, :cout], axis=0)
    ssq = jnp.sum(stats[:, 1, :cout], axis=0)
    mean = ssum / cnt
    var = jnp.maximum(ssq / cnt - mean * mean, 0.0)
    scale = gamma.astype(jnp.float32) * jax.lax.rsqrt(var + eps)
    shift = beta.astype(jnp.float32) - mean * scale

    # ---- affine + channel de-pad + NHWC->NCHW in ONE fused XLA pass ----
    y = conv_out[..., :cout].astype(jnp.float32)            # (n, m_img, cout)
    out = y * scale + shift
    out = out.reshape(n, ho, wo, cout)
    return jnp.transpose(out, (0, 3, 1, 2))


def _reference(x_nchw, weight_oihw, bias, gamma, beta, eps=1e-5):
    """Pure-JAX reference (conv + training-mode batchnorm)."""
    y = jax.lax.conv_general_dilated(
        x_nchw.astype(jnp.float32), weight_oihw.astype(jnp.float32),
        window_strides=(2, 2), padding=((1, 1), (1, 1)),
        dimension_numbers=("NCHW", "OIHW", "NCHW"))
    y = y + bias.reshape(1, -1, 1, 1)
    mean = jnp.mean(y, axis=(0, 2, 3), keepdims=True)
    var = jnp.mean((y - mean) ** 2, axis=(0, 2, 3), keepdims=True)
    yhat = (y - mean) * jax.lax.rsqrt(var + eps)
    return yhat * gamma.reshape(1, -1, 1, 1) + beta.reshape(1, -1, 1, 1)


if __name__ == "__main__":
    # Downsample(in_embed_dim=4, out_embed_dim=8, patch_size=2)
    N, CIN, COUT, H, W = 2, 4, 8, 16, 16

    key = jax.random.PRNGKey(0)
    kx, kw, kb = jax.random.split(key, 3)

    x = jax.random.normal(kx, (N, CIN, H, W), dtype=jnp.float32)

    # deterministic parameter init (shapes per nn.Conv2d / nn.BatchNorm2d)
    fan_in = CIN * 3 * 3
    w_bound = 1.0 / (fan_in ** 0.5)
    conv_w = jax.random.uniform(kw, (COUT, CIN, 3, 3), jnp.float32,
                                minval=-w_bound, maxval=w_bound)
    conv_b = jax.random.uniform(kb, (COUT,), jnp.float32,
                                minval=-w_bound, maxval=w_bound)
    bn_gamma = jnp.ones((COUT,), jnp.float32)   # BatchNorm2d default weight
    bn_beta = jnp.zeros((COUT,), jnp.float32)   # BatchNorm2d default bias

    ref = _reference(x, conv_w, conv_b, bn_gamma, bn_beta)

    # f32 MXU path: strict numerical check against the reference
    out = jax.block_until_ready(
        downsample(x, conv_w, conv_b, bn_gamma, bn_beta, use_bf16=False))
    assert out.shape == (N, COUT, H // 2, W // 2), out.shape
    err = float(jnp.max(jnp.abs(out - ref)))
    assert err < 1e-3, err

    # bf16 MXU path (default, throughput-oriented): loose check only
    out_bf16 = jax.block_until_ready(
        downsample(x, conv_w, conv_b, bn_gamma, bn_beta, use_bf16=True))
    assert out_bf16.shape == (N, COUT, H // 2, W // 2), out_bf16.shape
    err_bf16 = float(jnp.max(jnp.abs(out_bf16 - ref)))
    assert err_bf16 < 2.5e-1, err_bf16

    print("KERNEL_OK")
</pallas_src>

<mosaic_0001>
module attributes {stable_mosaic.version = 11 : i64} {
  func.func @_conv_stats_kernel(%arg0: i32, %arg1: memref<1x9x9x4xf32, #tpu.memory_space<vmem>>, %arg2: memref<1x9x9x4xf32, #tpu.memory_space<vmem>>, %arg3: memref<1x9x9x4xf32, #tpu.memory_space<vmem>>, %arg4: memref<1x9x9x4xf32, #tpu.memory_space<vmem>>, %arg5: memref<9x4x128xf32, #tpu.memory_space<vmem>>, %arg6: memref<1x128xf32, #tpu.memory_space<vmem>>, %arg7: memref<1x64x128xf32, #tpu.memory_space<vmem>>, %arg8: memref<1x2x128xf32, #tpu.memory_space<vmem>>) attributes {dimension_semantics = [#tpu.dimension_semantics<parallel>], iteration_bounds = array<i64: 2>, scalar_prefetch = 0 : i64, scratch_operands = 0 : i64, tpu.core_type = #tpu.core_type<tc>, window_params = [{transform_indices = @transform_0, window_bounds = array<i64: 1, 9, 9, 4>}, {transform_indices = @transform_1, window_bounds = array<i64: 1, 9, 9, 4>}, {transform_indices = @transform_2, window_bounds = array<i64: 1, 9, 9, 4>}, {transform_indices = @transform_3, window_bounds = array<i64: 1, 9, 9, 4>}, {pipeline_mode = #tpu.pipeline_mode<synchronous>, transform_indices = @transform_4, window_bounds = array<i64: 9, 4, 128>}, {pipeline_mode = #tpu.pipeline_mode<synchronous>, transform_indices = @transform_5, window_bounds = array<i64: 1, 128>}, {transform_indices = @transform_6, window_bounds = array<i64: 1, 64, 128>}, {transform_indices = @transform_7, window_bounds = array<i64: 1, 2, 128>}]} {
    %c0 = arith.constant 0 : index
    %c0_0 = arith.constant 0 : index
    %c0_1 = arith.constant 0 : index
    %c0_2 = arith.constant 0 : index
    %0 = vector.load %arg1[%c0, %c0_0, %c0_1, %c0_2] : memref<1x9x9x4xf32, #tpu.memory_space<vmem>>, vector<1x9x9x4xf32>
    %1 = vector.shape_cast %0 : vector<1x9x9x4xf32> to vector<9x9x4xf32>
    %c0_3 = arith.constant 0 : index
    %c0_4 = arith.constant 0 : index
    %c0_5 = arith.constant 0 : index
    %c0_6 = arith.constant 0 : index
    %2 = vector.load %arg2[%c0_3, %c0_4, %c0_5, %c0_6] : memref<1x9x9x4xf32, #tpu.memory_space<vmem>>, vector<1x9x9x4xf32>
    %3 = vector.shape_cast %2 : vector<1x9x9x4xf32> to vector<9x9x4xf32>
    %c0_7 = arith.constant 0 : index
    %c0_8 = arith.constant 0 : index
    %c0_9 = arith.constant 0 : index
    %c0_10 = arith.constant 0 : index
    %4 = vector.load %arg3[%c0_7, %c0_8, %c0_9, %c0_10] : memref<1x9x9x4xf32, #tpu.memory_space<vmem>>, vector<1x9x9x4xf32>
    %5 = vector.shape_cast %4 : vector<1x9x9x4xf32> to vector<9x9x4xf32>
    %c0_11 = arith.constant 0 : index
    %c0_12 = arith.constant 0 : index
    %c0_13 = arith.constant 0 : index
    %c0_14 = arith.constant 0 : index
    %6 = vector.load %arg4[%c0_11, %c0_12, %c0_13, %c0_14] : memref<1x9x9x4xf32, #tpu.memory_space<vmem>>, vector<1x9x9x4xf32>
    %7 = vector.shape_cast %6 : vector<1x9x9x4xf32> to vector<9x9x4xf32>
    %8 = vector.extract_strided_slice %1 {offsets = [0, 0, 0], sizes = [8, 8, 4], strides = [1, 1, 1]} : vector<9x9x4xf32> to vector<8x8x4xf32>
    %9 = vector.shape_cast %8 : vector<8x8x4xf32> to vector<64x4xf32>
    %c0_15 = arith.constant 0 : index
    %c0_16 = arith.constant 0 : index
    %c0_17 = arith.constant 0 : index
    %10 = vector.load %arg5[%c0_15, %c0_16, %c0_17] : memref<9x4x128xf32, #tpu.memory_space<vmem>>, vector<1x4x128xf32>
    %11 = vector.shape_cast %10 : vector<1x4x128xf32> to vector<4x128xf32>
    %cst = arith.constant dense<0.000000e+00> : vector<64x128xf32>
    %12 = tpu.matmul %9, %11, %cst {dimension_numbers = #tpu.dot_dimension_numbers<[1], [0], [0], [1], [0, 0, 1, 1], [], []>} : vector<64x4xf32>, vector<4x128xf32>, vector<64x128xf32> -> vector<64x128xf32>
    %13 = vector.extract_strided_slice %3 {offsets = [0, 0, 0], sizes = [8, 8, 4], strides = [1, 1, 1]} : vector<9x9x4xf32> to vector<8x8x4xf32>
    %14 = vector.shape_cast %13 : vector<8x8x4xf32> to vector<64x4xf32>
    %c1 = arith.constant 1 : index
    %c0_18 = arith.constant 0 : index
    %c0_19 = arith.constant 0 : index
    %15 = vector.load %arg5[%c1, %c0_18, %c0_19] : memref<9x4x128xf32, #tpu.memory_space<vmem>>, vector<1x4x128xf32>
    %16 = vector.shape_cast %15 : vector<1x4x128xf32> to vector<4x128xf32>
    %cst_20 = arith.constant dense<0.000000e+00> : vector<64x128xf32>
    %17 = tpu.matmul %14, %16, %cst_20 {dimension_numbers = #tpu.dot_dimension_numbers<[1], [0], [0], [1], [0, 0, 1, 1], [], []>} : vector<64x4xf32>, vector<4x128xf32>, vector<64x128xf32> -> vector<64x128xf32>
    %18 = arith.addf %12, %17 : vector<64x128xf32>
    %19 = vector.extract_strided_slice %1 {offsets = [0, 1, 0], sizes = [8, 8, 4], strides = [1, 1, 1]} : vector<9x9x4xf32> to vector<8x8x4xf32>
    %20 = vector.shape_cast %19 : vector<8x8x4xf32> to vector<64x4xf32>
    %c2 = arith.constant 2 : index
    %c0_21 = arith.constant 0 : index
    %c0_22 = arith.constant 0 : index
    %21 = vector.load %arg5[%c2, %c0_21, %c0_22] : memref<9x4x128xf32, #tpu.memory_space<vmem>>, vector<1x4x128xf32>
    %22 = vector.shape_cast %21 : vector<1x4x128xf32> to vector<4x128xf32>
    %cst_23 = arith.constant dense<0.000000e+00> : vector<64x128xf32>
    %23 = tpu.matmul %20, %22, %cst_23 {dimension_numbers = #tpu.dot_dimension_numbers<[1], [0], [0], [1], [0, 0, 1, 1], [], []>} : vector<64x4xf32>, vector<4x128xf32>, vector<64x128xf32> -> vector<64x128xf32>
    %24 = arith.addf %18, %23 : vector<64x128xf32>
    %25 = vector.extract_strided_slice %5 {offsets = [0, 0, 0], sizes = [8, 8, 4], strides = [1, 1, 1]} : vector<9x9x4xf32> to vector<8x8x4xf32>
    %26 = vector.shape_cast %25 : vector<8x8x4xf32> to vector<64x4xf32>
    %c3 = arith.constant 3 : index
    %c0_24 = arith.constant 0 : index
    %c0_25 = arith.constant 0 : index
    %27 = vector.load %arg5[%c3, %c0_24, %c0_25] : memref<9x4x128xf32, #tpu.memory_space<vmem>>, vector<1x4x128xf32>
    %28 = vector.shape_cast %27 : vector<1x4x128xf32> to vector<4x128xf32>
    %cst_26 = arith.constant dense<0.000000e+00> : vector<64x128xf32>
    %29 = tpu.matmul %26, %28, %cst_26 {dimension_numbers = #tpu.dot_dimension_numbers<[1], [0], [0], [1], [0, 0, 1, 1], [], []>} : vector<64x4xf32>, vector<4x128xf32>, vector<64x128xf32> -> vector<64x128xf32>
    %30 = arith.addf %24, %29 : vector<64x128xf32>
    %31 = vector.extract_strided_slice %7 {offsets = [0, 0, 0], sizes = [8, 8, 4], strides = [1, 1, 1]} : vector<9x9x4xf32> to vector<8x8x4xf32>
    %32 = vector.shape_cast %31 : vector<8x8x4xf32> to vector<64x4xf32>
    %c4 = arith.constant 4 : index
    %c0_27 = arith.constant 0 : index
    %c0_28 = arith.constant 0 : index
    %33 = vector.load %arg5[%c4, %c0_27, %c0_28] : memref<9x4x128xf32, #tpu.memory_space<vmem>>, vector<1x4x128xf32>
    %34 = vector.shape_cast %33 : vector<1x4x128xf32> to vector<4x128xf32>
    %cst_29 = arith.constant dense<0.000000e+00> : vector<64x128xf32>
    %35 = tpu.matmul %32, %34, %cst_29 {dimension_numbers = #tpu.dot_dimension_numbers<[1], [0], [0], [1], [0, 0, 1, 1], [], []>} : vector<64x4xf32>, vector<4x128xf32>, vector<64x128xf32> -> vector<64x128xf32>
    %36 = arith.addf %30, %35 : vector<64x128xf32>
    %37 = vector.extract_strided_slice %5 {offsets = [0, 1, 0], sizes = [8, 8, 4], strides = [1, 1, 1]} : vector<9x9x4xf32> to vector<8x8x4xf32>
    %38 = vector.shape_cast %37 : vector<8x8x4xf32> to vector<64x4xf32>
    %c5 = arith.constant 5 : index
    %c0_30 = arith.constant 0 : index
    %c0_31 = arith.constant 0 : index
    %39 = vector.load %arg5[%c5, %c0_30, %c0_31] : memref<9x4x128xf32, #tpu.memory_space<vmem>>, vector<1x4x128xf32>
    %40 = vector.shape_cast %39 : vector<1x4x128xf32> to vector<4x128xf32>
    %cst_32 = arith.constant dense<0.000000e+00> : vector<64x128xf32>
    %41 = tpu.matmul %38, %40, %cst_32 {dimension_numbers = #tpu.dot_dimension_numbers<[1], [0], [0], [1], [0, 0, 1, 1], [], []>} : vector<64x4xf32>, vector<4x128xf32>, vector<64x128xf32> -> vector<64x128xf32>
    %42 = arith.addf %36, %41 : vector<64x128xf32>
    %43 = vector.extract_strided_slice %1 {offsets = [1, 0, 0], sizes = [8, 8, 4], strides = [1, 1, 1]} : vector<9x9x4xf32> to vector<8x8x4xf32>
    %44 = vector.shape_cast %43 : vector<8x8x4xf32> to vector<64x4xf32>
    %c6 = arith.constant 6 : index
    %c0_33 = arith.constant 0 : index
    %c0_34 = arith.constant 0 : index
    %45 = vector.load %arg5[%c6, %c0_33, %c0_34] : memref<9x4x128xf32, #tpu.memory_space<vmem>>, vector<1x4x128xf32>
    %46 = vector.shape_cast %45 : vector<1x4x128xf32> to vector<4x128xf32>
    %cst_35 = arith.constant dense<0.000000e+00> : vector<64x128xf32>
    %47 = tpu.matmul %44, %46, %cst_35 {dimension_numbers = #tpu.dot_dimension_numbers<[1], [0], [0], [1], [0, 0, 1, 1], [], []>} : vector<64x4xf32>, vector<4x128xf32>, vector<64x128xf32> -> vector<64x128xf32>
    %48 = arith.addf %42, %47 : vector<64x128xf32>
    %49 = vector.extract_strided_slice %3 {offsets = [1, 0, 0], sizes = [8, 8, 4], strides = [1, 1, 1]} : vector<9x9x4xf32> to vector<8x8x4xf32>
    %50 = vector.shape_cast %49 : vector<8x8x4xf32> to vector<64x4xf32>
    %c7 = arith.constant 7 : index
    %c0_36 = arith.constant 0 : index
    %c0_37 = arith.constant 0 : index
    %51 = vector.load %arg5[%c7, %c0_36, %c0_37] : memref<9x4x128xf32, #tpu.memory_space<vmem>>, vector<1x4x128xf32>
    %52 = vector.shape_cast %51 : vector<1x4x128xf32> to vector<4x128xf32>
    %cst_38 = arith.constant dense<0.000000e+00> : vector<64x128xf32>
    %53 = tpu.matmul %50, %52, %cst_38 {dimension_numbers = #tpu.dot_dimension_numbers<[1], [0], [0], [1], [0, 0, 1, 1], [], []>} : vector<64x4xf32>, vector<4x128xf32>, vector<64x128xf32> -> vector<64x128xf32>
    %54 = arith.addf %48, %53 : vector<64x128xf32>
    %55 = vector.extract_strided_slice %1 {offsets = [1, 1, 0], sizes = [8, 8, 4], strides = [1, 1, 1]} : vector<9x9x4xf32> to vector<8x8x4xf32>
    %56 = vector.shape_cast %55 : vector<8x8x4xf32> to vector<64x4xf32>
    %c8 = arith.constant 8 : index
    %c0_39 = arith.constant 0 : index
    %c0_40 = arith.constant 0 : index
    %57 = vector.load %arg5[%c8, %c0_39, %c0_40] : memref<9x4x128xf32, #tpu.memory_space<vmem>>, vector<1x4x128xf32>
    %58 = vector.shape_cast %57 : vector<1x4x128xf32> to vector<4x128xf32>
    %cst_41 = arith.constant dense<0.000000e+00> : vector<64x128xf32>
    %59 = tpu.matmul %56, %58, %cst_41 {dimension_numbers = #tpu.dot_dimension_numbers<[1], [0], [0], [1], [0, 0, 1, 1], [], []>} : vector<64x4xf32>, vector<4x128xf32>, vector<64x128xf32> -> vector<64x128xf32>
    %60 = arith.addf %54, %59 : vector<64x128xf32>
    %c0_42 = arith.constant 0 : index
    %c0_43 = arith.constant 0 : index
    %61 = vector.load %arg6[%c0_42, %c0_43] : memref<1x128xf32, #tpu.memory_space<vmem>>, vector<1x128xf32>
    %62 = vector.broadcast %61 : vector<1x128xf32> to vector<64x128xf32>
    %63 = arith.addf %60, %62 : vector<64x128xf32>
    %c0_44 = arith.constant 0 : index
    %c0_45 = arith.constant 0 : index
    %c0_46 = arith.constant 0 : index
    %64 = vector.load %arg7[%c0_44, %c0_45, %c0_46] : memref<1x64x128xf32, #tpu.memory_space<vmem>>, vector<1x64x128xf32>
    %65 = vector.shape_cast %64 : vector<1x64x128xf32> to vector<64x128xf32>
    %66 = vector.shape_cast %63 : vector<64x128xf32> to vector<1x64x128xf32>
    tpu.vector_store %arg7[%c0_44, %c0_45, %c0_46], %66 {strides = array<i32>} : memref<1x64x128xf32, #tpu.memory_space<vmem>>, vector<1x64x128xf32>,
    %cst_47 = arith.constant dense<0.000000e+00> : vector<128xf32>
    %67 = vector.multi_reduction <add>, %63, %cst_47 [0] : vector<64x128xf32> to vector<128xf32>
    %68 = vector.shape_cast %67 : vector<128xf32> to vector<1x128xf32>
    %69 = arith.mulf %63, %63 : vector<64x128xf32>
    %cst_48 = arith.constant dense<0.000000e+00> : vector<128xf32>
    %70 = vector.multi_reduction <add>, %69, %cst_48 [0] : vector<64x128xf32> to vector<128xf32>
    %71 = vector.shape_cast %70 : vector<128xf32> to vector<1x128xf32>
    %72 = tpu.concatenate %68, %71 in 0 : vector<1x128xf32>, vector<1x128xf32> -> vector<2x128xf32>
    %c0_49 = arith.constant 0 : index
    %c0_50 = arith.constant 0 : index
    %c0_51 = arith.constant 0 : index
    %73 = vector.load %arg8[%c0_49, %c0_50, %c0_51] : memref<1x2x128xf32, #tpu.memory_space<vmem>>, vector<1x2x128xf32>
    %74 = vector.shape_cast %73 : vector<1x2x128xf32> to vector<2x128xf32>
    %75 = vector.shape_cast %72 : vector<2x128xf32> to vector<1x2x128xf32>
    tpu.vector_store %arg8[%c0_49, %c0_50, %c0_51], %75 {strides = array<i32>} : memref<1x2x128xf32, #tpu.memory_space<vmem>>, vector<1x2x128xf32>,
    return
  }
  func.func @transform_0(%arg0: i32) -> (i32, i32, i32, i32) {
    %c0_i32 = arith.constant 0 : i32
    %c0_i32_0 = arith.constant 0 : i32
    %c0_i32_1 = arith.constant 0 : i32
    %c0_i32_2 = arith.constant 0 : i32
    return %arg0, %c0_i32, %c0_i32_0, %c0_i32_1 : i32, i32, i32, i32
  }
  func.func @transform_1(%arg0: i32) -> (i32, i32, i32, i32) {
    %c0_i32 = arith.constant 0 : i32
    %c0_i32_0 = arith.constant 0 : i32
    %c0_i32_1 = arith.constant 0 : i32
    %c0_i32_2 = arith.constant 0 : i32
    return %arg0, %c0_i32, %c0_i32_0, %c0_i32_1 : i32, i32, i32, i32
  }
  func.func @transform_2(%arg0: i32) -> (i32, i32, i32, i32) {
    %c0_i32 = arith.constant 0 : i32
    %c0_i32_0 = arith.constant 0 : i32
    %c0_i32_1 = arith.constant 0 : i32
    %c0_i32_2 = arith.constant 0 : i32
    return %arg0, %c0_i32, %c0_i32_0, %c0_i32_1 : i32, i32, i32, i32
  }
  func.func @transform_3(%arg0: i32) -> (i32, i32, i32, i32) {
    %c0_i32 = arith.constant 0 : i32
    %c0_i32_0 = arith.constant 0 : i32
    %c0_i32_1 = arith.constant 0 : i32
    %c0_i32_2 = arith.constant 0 : i32
    return %arg0, %c0_i32, %c0_i32_0, %c0_i32_1 : i32, i32, i32, i32
  }
  func.func @transform_4(%arg0: i32) -> (i32, i32, i32) {
    %c0_i32 = arith.constant 0 : i32
    %c0_i32_0 = arith.constant 0 : i32
    %c0_i32_1 = arith.constant 0 : i32
    %c0_i32_2 = arith.constant 0 : i32
    return %c0_i32, %c0_i32_0, %c0_i32_1 : i32, i32, i32
  }
  func.func @transform_5(%arg0: i32) -> (i32, i32) {
    %c0_i32 = arith.constant 0 : i32
    %c0_i32_0 = arith.constant 0 : i32
    %c0_i32_1 = arith.constant 0 : i32
    return %c0_i32, %c0_i32_0 : i32, i32
  }
  func.func @transform_6(%arg0: i32) -> (i32, i32, i32) {
    %c0_i32 = arith.constant 0 : i32
    %c0_i32_0 = arith.constant 0 : i32
    %c0_i32_1 = arith.constant 0 : i32
    return %arg0, %c0_i32, %c0_i32_0 : i32, i32, i32
  }
  func.func @transform_7(%arg0: i32) -> (i32, i32, i32) {
    %c0_i32 = arith.constant 0 : i32
    %c0_i32_0 = arith.constant 0 : i32
    %c0_i32_1 = arith.constant 0 : i32
    return %arg0, %c0_i32, %c0_i32_0 : i32, i32, i32
  }
}

</mosaic_0001>

<llo_original>
// kernel: downsample.1
$region0: #{downsample.1}
  #allocation0 [shape = 'u32[]', space=smem, size = 0x4, offset = 0x4, fixed_abs, tag = 'smem constant byte address 0x4 - core index']
  #allocation1 [shape = 'u32[72,128]{1,0:T(1,128)}', space=vmem, size = 0x9000, scoped, tag = 'internal scratch']
  %s0 = inlined_call_operand.vmem [shape: f32[2,9,9,4], index: 0, kind: input, shape index: {}]
  %s1 = inlined_call_operand.vmem [shape: f32[2,9,9,4], index: 1, kind: input, shape index: {}]
  %s2 = inlined_call_operand.vmem [shape: f32[2,9,9,4], index: 2, kind: input, shape index: {}]
  %s3 = inlined_call_operand.vmem [shape: f32[2,9,9,4], index: 3, kind: input, shape index: {}]
  %s4 = inlined_call_operand.vmem [shape: f32[9,4,128], index: 4, kind: input, shape index: {}]
  %s5 = inlined_call_operand.vmem [shape: f32[1,128], index: 5, kind: input, shape index: {}]
  %s6 = inlined_call_operand.vmem [shape: f32[2,64,128], index: 6, kind: output, shape index: {0}]
  %s7 = inlined_call_operand.vmem [shape: f32[2,2,128], index: 7, kind: output, shape index: {1}]
  %8 = xla_tuple %s6, %s7
  %s9 = sld [smem:[#allocation0]]
  $region65: #{downsample.1} parent=0
    _
  %s11 = ssub.s32 1, %s9
  %s12 = scalar_select 0, %s11, %s9
  loop: start=0, step=1, limit=4
  $region2: #{downsample.1} parent=0 // loop_pre_header
    _
  $region3: #{downsample.1} parent=0 // loop_header
    %s14 = sphi 0, %s18
    %p15 = scmp.ge.s32.totalorder %s14, 4
    %s24 = sphi 0, %s26
    %s27 = sphi 0, %s24
    %s28 = sphi 0, %s27
    %s44 = sphi 0, %s28
    %s50 = sphi 0, %s52
    %s53 = sphi 0, %s50
    %s54 = sphi 0, %s53
    %s70 = sphi 0, %s54
    %s76 = sphi 0, %s78
    %s79 = sphi 0, %s76
    %s80 = sphi 0, %s79
    %s96 = sphi 0, %s80
    %s102 = sphi 0, %s104
    %s105 = sphi 0, %s102
    %s106 = sphi 0, %s105
    %s122 = sphi 0, %s106
    %s126 = sphi 0, %s126
    %s128 = sphi 0, %s126
    %s129 = sphi 0, %s128
    %s143 = sphi 0, %s129
    %s147 = sphi 0, %s147
    %s149 = sphi 0, %s147
    %s150 = sphi 0, %s149
    %s164 = sphi 0, %s150
    %s170 = sphi 0, %s172
    %s173 = sphi 0, %s170
    %s174 = sphi 0, %s173
    %s190 = sphi 0, %s174
    %s196 = sphi 0, %s198
    %s199 = sphi 0, %s196
    %s200 = sphi 0, %s199
    %s216 = sphi 0, %s200
  $region4: #{downsample.1} parent=0 // loop_header_branch
    %17 = sbr.rel (%p15) target = $region8
  $region5: #{downsample.1} parent=0 // loop_body
    %s19 = ssub.s32 %s14, 1
    %s20 = ssub.s32 %s14, 2
    %s21 = sadd.s32 %s14, 1
    %s22 = ssub.s32 %s14, %s21
    %p23 = scmp.eq.s32.totalorder %s22, 0
    %s25 = sadd.s32 %s24, 1
    %s26 = scalar_select %p23, %s24, %s25
    %p29 = pneg %p23
    %p30 = scmp.eq.s32.totalorder %s14, 1
    %p31 = por %p29, %p30
    %p32 = scmp.ne.s32.totalorder %s24, %s27
    %p33 = scmp.eq.s32.totalorder %s14, 0
    %p34 = por %p32, %p33
    %p35 = scmp.ne.s32.totalorder %s24, %s27
    %p36 = scmp.eq.s32.totalorder %s19, 1
    %p37 = por %p35, %p36
    %p38 = scmp.ne.s32.totalorder %s27, %s28
    %p39 = scmp.eq.s32.totalorder %s19, 0
    %p40 = por %p38, %p39
    %p41 = scmp.ne.s32.totalorder %s27, %s28
    %p42 = scmp.eq.s32.totalorder %s20, 1
    %p43 = por %p41, %p42
    %p45 = scmp.ne.s32.totalorder %s28, %s44
    %p46 = scmp.eq.s32.totalorder %s20, 0
    %p47 = por %p45, %p46
    %s48 = ssub.s32 %s14, %s21
    %p49 = scmp.eq.s32.totalorder %s48, 0
    %s51 = sadd.s32 %s50, 1
    %s52 = scalar_select %p49, %s50, %s51
    %p55 = pneg %p49
    %p56 = scmp.eq.s32.totalorder %s14, 1
    %p57 = por %p55, %p56
    %p58 = scmp.ne.s32.totalorder %s50, %s53
    %p59 = scmp.eq.s32.totalorder %s14, 0
    %p60 = por %p58, %p59
    %p61 = scmp.ne.s32.totalorder %s50, %s53
    %p62 = scmp.eq.s32.totalorder %s19, 1
    %p63 = por %p61, %p62
    %p64 = scmp.ne.s32.totalorder %s53, %s54
    %p65 = scmp.eq.s32.totalorder %s19, 0
    %p66 = por %p64, %p65
    %p67 = scmp.ne.s32.totalorder %s53, %s54
    %p68 = scmp.eq.s32.totalorder %s20, 1
    %p69 = por %p67, %p68
    %p71 = scmp.ne.s32.totalorder %s54, %s70
    %p72 = scmp.eq.s32.totalorder %s20, 0
    %p73 = por %p71, %p72
    %s74 = ssub.s32 %s14, %s21
    %p75 = scmp.eq.s32.totalorder %s74, 0
    %s77 = sadd.s32 %s76, 1
    %s78 = scalar_select %p75, %s76, %s77
    %p81 = pneg %p75
    %p82 = scmp.eq.s32.totalorder %s14, 1
    %p83 = por %p81, %p82
    %p84 = scmp.ne.s32.totalorder %s76, %s79
    %p85 = scmp.eq.s32.totalorder %s14, 0
    %p86 = por %p84, %p85
    %p87 = scmp.ne.s32.totalorder %s76, %s79
    %p88 = scmp.eq.s32.totalorder %s19, 1
    %p89 = por %p87, %p88
    %p90 = scmp.ne.s32.totalorder %s79, %s80
    %p91 = scmp.eq.s32.totalorder %s19, 0
    %p92 = por %p90, %p91
    %p93 = scmp.ne.s32.totalorder %s79, %s80
    %p94 = scmp.eq.s32.totalorder %s20, 1
    %p95 = por %p93, %p94
    %p97 = scmp.ne.s32.totalorder %s80, %s96
    %p98 = scmp.eq.s32.totalorder %s20, 0
    %p99 = por %p97, %p98
    %s100 = ssub.s32 %s14, %s21
    %p101 = scmp.eq.s32.totalorder %s100, 0
    %s103 = sadd.s32 %s102, 1
    %s104 = scalar_select %p101, %s102, %s103
    %p107 = pneg %p101
    %p108 = scmp.eq.s32.totalorder %s14, 1
    %p109 = por %p107, %p108
    %p110 = scmp.ne.s32.totalorder %s102, %s105
    %p111 = scmp.eq.s32.totalorder %s14, 0
    %p112 = por %p110, %p111
    %p113 = scmp.ne.s32.totalorder %s102, %s105
    %p114 = scmp.eq.s32.totalorder %s19, 1
    %p115 = por %p113, %p114
    %p116 = scmp.ne.s32.totalorder %s105, %s106
    %p117 = scmp.eq.s32.totalorder %s19, 0
    %p118 = por %p116, %p117
    %p119 = scmp.ne.s32.totalorder %s105, %s106
    %p120 = scmp.eq.s32.totalorder %s20, 1
    %p121 = por %p119, %p120
    %p123 = scmp.ne.s32.totalorder %s106, %s122
    %p124 = scmp.eq.s32.totalorder %s20, 0
    %p125 = por %p123, %p124
    %s127 = sadd.s32 %s126, 1
    %p130 = scmp.eq.s32.totalorder %s14, 1
    %p131 = scmp.ne.s32.totalorder %s126, %s128
    %p132 = scmp.eq.s32.totalorder %s14, 0
    %p133 = por %p131, %p132
    %p134 = scmp.ne.s32.totalorder %s126, %s128
    %p135 = scmp.eq.s32.totalorder %s19, 1
    %p136 = por %p134, %p135
    %p137 = scmp.ne.s32.totalorder %s128, %s129
    %p138 = scmp.eq.s32.totalorder %s19, 0
    %p139 = por %p137, %p138
    %p140 = scmp.ne.s32.totalorder %s128, %s129
    %p141 = scmp.eq.s32.totalorder %s20, 1
    %p142 = por %p140, %p141
    %p144 = scmp.ne.s32.totalorder %s129, %s143
    %p145 = scmp.eq.s32.totalorder %s20, 0
    %p146 = por %p144, %p145
    %s148 = sadd.s32 %s147, 1
    %p151 = scmp.eq.s32.totalorder %s14, 1
    %p152 = scmp.ne.s32.totalorder %s147, %s149
    %p153 = scmp.eq.s32.totalorder %s14, 0
    %p154 = por %p152, %p153
    %p155 = scmp.ne.s32.totalorder %s147, %s149
    %p156 = scmp.eq.s32.totalorder %s19, 1
    %p157 = por %p155, %p156
    %p158 = scmp.ne.s32.totalorder %s149, %s150
    %p159 = scmp.eq.s32.totalorder %s19, 0
    %p160 = por %p158, %p159
    %p161 = scmp.ne.s32.totalorder %s149, %s150
    %p162 = scmp.eq.s32.totalorder %s20, 1
    %p163 = por %p161, %p162
    %p165 = scmp.ne.s32.totalorder %s150, %s164
    %p166 = scmp.eq.s32.totalorder %s20, 0
    %p167 = por %p165, %p166
    %s168 = ssub.s32 %s14, %s21
    %p169 = scmp.eq.s32.totalorder %s168, 0
    %s171 = sadd.s32 %s170, 1
    %s172 = scalar_select %p169, %s170, %s171
    %p175 = pneg %p169
    %p176 = scmp.eq.s32.totalorder %s14, 1
    %p177 = por %p175, %p176
    %p178 = scmp.ne.s32.totalorder %s170, %s173
    %p179 = scmp.eq.s32.totalorder %s14, 0
    %p180 = por %p178, %p179
    %p181 = scmp.ne.s32.totalorder %s170, %s173
    %p182 = scmp.eq.s32.totalorder %s19, 1
    %p183 = por %p181, %p182
    %p184 = scmp.ne.s32.totalorder %s173, %s174
    %p185 = scmp.eq.s32.totalorder %s19, 0
    %p186 = por %p184, %p185
    %p187 = scmp.ne.s32.totalorder %s173, %s174
    %p188 = scmp.eq.s32.totalorder %s20, 1
    %p189 = por %p187, %p188
    %p191 = scmp.ne.s32.totalorder %s174, %s190
    %p192 = scmp.eq.s32.totalorder %s20, 0
    %p193 = por %p191, %p192
    %s194 = ssub.s32 %s14, %s21
    %p195 = scmp.eq.s32.totalorder %s194, 0
    %s197 = sadd.s32 %s196, 1
    %s198 = scalar_select %p195, %s196, %s197
    %p201 = pneg %p195
    %p202 = scmp.eq.s32.totalorder %s14, 1
    %p203 = por %p201, %p202
    %p204 = scmp.ne.s32.totalorder %s196, %s199
    %p205 = scmp.eq.s32.totalorder %s14, 0
    %p206 = por %p204, %p205
    %p207 = scmp.ne.s32.totalorder %s196, %s199
    %p208 = scmp.eq.s32.totalorder %s19, 1
    %p209 = por %p207, %p208
    %p210 = scmp.ne.s32.totalorder %s199, %s200
    %p211 = scmp.eq.s32.totalorder %s19, 0
    %p212 = por %p210, %p211
    %p213 = scmp.ne.s32.totalorder %s199, %s200
    %p214 = scmp.eq.s32.totalorder %s20, 1
    %p215 = por %p213, %p214
    %p217 = scmp.ne.s32.totalorder %s200, %s216
    %p218 = scmp.eq.s32.totalorder %s20, 0
    %p219 = por %p217, %p218
    %p220 = scmp.le.s32.totalorder 1, %s14
    %p221 = scmp.lt.s32.totalorder %s14, 3
    %p222 = pnand %p220, %p221
    %p223 = pneg %p222
    // Predicated region
    $region9: #{downsample.1} parent=5 // pred_check
      _
    $region10: #{downsample.1} parent=5 // pred_check_branch
      %225 = sbr.rel (%p222) target = $region12
    $region11: #{downsample.1} parent=5 // pred_region
      %s226 = ssub.s32 %s14, 1
      // Predicated region
      $region13: #{downsample.1} parent=11 // pred_check
        %p227 = pneg %p139
      $region14: #{downsample.1} parent=11 // pred_check_branch
        %229 = sbr.rel (%p227) target = $region16
      $region15: #{downsample.1} parent=11 // pred_region
        _
      $region16: #{downsample.1} parent=11 // pred_fallthru
        _
      // Predicated region
      $region17: #{downsample.1} parent=11 // pred_check
        %p230 = pneg %p160
      $region18: #{downsample.1} parent=11 // pred_check_branch
        %232 = sbr.rel (%p230) target = $region20
      $region19: #{downsample.1} parent=11 // pred_region
        _
      $region20: #{downsample.1} parent=11 // pred_fallthru
        _
    $region12: #{downsample.1} parent=5 // pred_fallthru
      _
    %p233 = scmp.lt.s32.totalorder %s14, 2
    // Predicated region
    $region21: #{downsample.1} parent=5 // pred_check
      %p234 = pneg %p233
    $region22: #{downsample.1} parent=5 // pred_check_branch
      %236 = sbr.rel (%p234) target = $region24
    $region23: #{downsample.1} parent=5 // pred_region
      // Predicated region
      $region25: #{downsample.1} parent=23 // pred_check
        %p237 = pneg %p34
      $region26: #{downsample.1} parent=23 // pred_check_branch
        %239 = sbr.rel (%p237) target = $region28
      $region27: #{downsample.1} parent=23 // pred_region
        %p240 = scmp.lt.s32.totalorder %s14, 1
        %s241 = scalar_select %p240, %s14, 1
        %s242 = smul.addr %s241, 18
        %s243 = smul.addr %s242, 8
        %s244 = scalar_lea.vmem %s0, %s243
      $region28: #{downsample.1} parent=23 // pred_fallthru
        _
      // Predicated region
      $region29: #{downsample.1} parent=23 // pred_check
        %p245 = pneg %p60
      $region30: #{downsample.1} parent=23 // pred_check_branch
        %247 = sbr.rel (%p245) target = $region32
      $region31: #{downsample.1} parent=23 // pred_region
        %p248 = scmp.lt.s32.totalorder %s14, 1
        %s249 = scalar_select %p248, %s14, 1
        %s250 = smul.addr %s249, 18
        %s251 = smul.addr %s250, 8
        %s252 = scalar_lea.vmem %s1, %s251
      $region32: #{downsample.1} parent=23 // pred_fallthru
        _
      // Predicated region
      $region33: #{downsample.1} parent=23 // pred_check
        %p253 = pneg %p86
      $region34: #{downsample.1} parent=23 // pred_check_branch
        %255 = sbr.rel (%p253) target = $region36
      $region35: #{downsample.1} parent=23 // pred_region
        %p256 = scmp.lt.s32.totalorder %s14, 1
        %s257 = scalar_select %p256, %s14, 1
        %s258 = smul.addr %s257, 18
        %s259 = smul.addr %s258, 8
        %s260 = scalar_lea.vmem %s2, %s259
      $region36: #{downsample.1} parent=23 // pred_fallthru
        _
      // Predicated region
      $region37: #{downsample.1} parent=23 // pred_check
        %p261 = pneg %p112
      $region38: #{downsample.1} parent=23 // pred_check_branch
        %263 = sbr.rel (%p261) target = $region40
      $region39: #{downsample.1} parent=23 // pred_region
        %p264 = scmp.lt.s32.totalorder %s14, 1
        %s265 = scalar_select %p264, %s14, 1
        %s266 = smul.addr %s265, 18
        %s267 = smul.addr %s266, 8
        %s268 = scalar_lea.vmem %s3, %s267
      $region40: #{downsample.1} parent=23 // pred_fallthru
        _
    $region24: #{downsample.1} parent=5 // pred_fallthru
      _
    %p269 = scmp.le.s32.totalorder 1, %s14
    %p270 = scmp.lt.s32.totalorder %s14, 3
    %p271 = pnand %p269, %p270
    %p272 = pneg %p271
    // Predicated region
    $region41: #{downsample.1} parent=5 // pred_check
      _
    $region42: #{downsample.1} parent=5 // pred_check_branch
      %274 = sbr.rel (%p271) target = $region44
    $region43: #{downsample.1} parent=5 // pred_region
      %s275 = ssub.s32 %s14, 1
      %p276 = scmp.lt.s32.totalorder %s19, 1
      %s277 = scalar_select %p276, %s19, 1
      %s278 = smul.addr %s277, 18
      %s279 = smul.addr %s278, 8
      %s280 = scalar_lea.vmem %s0, %s279
      %p281 = pneg %p40
      %p282 = pneg %p37
      %p283 = scmp.lt.s32.totalorder %s19, 1
      %s284 = scalar_select %p283, %s19, 1
      %s285 = smul.addr %s284, 18
      %s286 = smul.addr %s285, 8
      %s287 = scalar_lea.vmem %s1, %s286
      %p288 = pneg %p66
      %p289 = pneg %p63
      %p290 = scmp.lt.s32.totalorder %s19, 1
      %s291 = scalar_select %p290, %s19, 1
      %s292 = smul.addr %s291, 18
      %s293 = smul.addr %s292, 8
      %s294 = scalar_lea.vmem %s2, %s293
      %p295 = pneg %p92
      %p296 = pneg %p89
      %p297 = scmp.lt.s32.totalorder %s19, 1
      %s298 = scalar_select %p297, %s19, 1
      %s299 = smul.addr %s298, 18
      %s300 = smul.addr %s299, 8
      %s301 = scalar_lea.vmem %s3, %s300
      %p302 = pneg %p118
      %p303 = pneg %p115
      %p304 = pneg %p139
      %p305 = pneg %p136
      %p306 = pneg %p160
      %p307 = pneg %p157
      %p308 = pneg %p186
      %p309 = pneg %p183
      %p310 = scmp.lt.s32.totalorder %s19, 1
      %s311 = scalar_select %p310, %s19, 1
      %s312 = smul.addr %s311, 8
      %s313 = smul.addr %s312, 8
      %s314 = scalar_lea.vmem %s6, %s313
      %p315 = pneg %p212
      %p316 = pneg %p209
      %p317 = scmp.lt.s32.totalorder %s19, 1
      %s318 = scalar_select %p317, %s19, 1
      %s319 = smul.addr %s318, 2
      %s320 = scalar_lea.vmem %s7, %s319
      %p321 = scmp.lt.s32.totalorder %s19, 1
      %s322 = scalar_select %p321, %s19, 1
      %s323 = smul.addr %s322, 18
      %s324 = smul.addr %s323, 8
      %s325 = scalar_lea.vmem %s0, %s324
      %p326 = scmp.lt.s32.totalorder %s19, 1
      %s327 = scalar_select %p326, %s19, 1
      %s328 = smul.addr %s327, 18
      %s329 = smul.addr %s328, 8
      %s330 = scalar_lea.vmem %s1, %s329
      %p331 = scmp.lt.s32.totalorder %s19, 1
      %s332 = scalar_select %p331, %s19, 1
      %s333 = smul.addr %s332, 18
      %s334 = smul.addr %s333, 8
      %s335 = scalar_lea.vmem %s2, %s334
      %p336 = scmp.lt.s32.totalorder %s19, 1
      %s337 = scalar_select %p336, %s19, 1
      %s338 = smul.addr %s337, 18
      %s339 = smul.addr %s338, 8
      %s340 = scalar_lea.vmem %s3, %s339
      %p341 = scmp.lt.s32.totalorder %s19, 1
      %s342 = scalar_select %p341, %s19, 1
      %s343 = smul.addr %s342, 8
      %s344 = smul.addr %s343, 8
      %s345 = scalar_lea.vmem %s6, %s344
      %p346 = scmp.lt.s32.totalorder %s19, 1
      %s347 = scalar_select %p346, %s19, 1
      %s348 = smul.addr %s347, 2
      %s349 = scalar_lea.vmem %s7, %s348
      %v350 = vld [vmem:[%s325] sm:$0xff]
      %v351 = vld [vmem:[%s325 + $0x8] sm:$0x1]
      %v352 = vld [vmem:[%s325 + $0x10] sm:$0xff]
      %v353 = vld [vmem:[%s325 + $0x18] sm:$0x1]
      %v354 = vld [vmem:[%s325 + $0x20] sm:$0xff]
      %v355 = vld [vmem:[%s325 + $0x28] sm:$0x1]
      %v356 = vld [vmem:[%s325 + $0x30] sm:$0xff]
      %v357 = vld [vmem:[%s325 + $0x38] sm:$0x1]
      %v358 = vld [vmem:[%s325 + $0x40] sm:$0xff]
      %v359 = vld [vmem:[%s325 + $0x48] sm:$0x1]
      %v360 = vld [vmem:[%s325 + $0x50] sm:$0xff]
      %v361 = vld [vmem:[%s325 + $0x58] sm:$0x1]
      %v362 = vld [vmem:[%s325 + $0x60] sm:$0xff]
      %v363 = vld [vmem:[%s325 + $0x68] sm:$0x1]
      %v364 = vld [vmem:[%s325 + $0x70] sm:$0xff]
      %v365 = vld [vmem:[%s325 + $0x78] sm:$0x1]
      %v366 = vld [vmem:[%s325 + $0x80] sm:$0xff]
      %v367 = vld [vmem:[%s325 + $0x88] sm:$0x1]
      %v368 = vld [vmem:[%s330] sm:$0xff]
      %v369 = vld [vmem:[%s330 + $0x10] sm:$0xff]
      %v370 = vld [vmem:[%s330 + $0x20] sm:$0xff]
      %v371 = vld [vmem:[%s330 + $0x30] sm:$0xff]
      %v372 = vld [vmem:[%s330 + $0x40] sm:$0xff]
      %v373 = vld [vmem:[%s330 + $0x50] sm:$0xff]
      %v374 = vld [vmem:[%s330 + $0x60] sm:$0xff]
      %v375 = vld [vmem:[%s330 + $0x70] sm:$0xff]
      %v376 = vld [vmem:[%s330 + $0x80] sm:$0xff]
      %v377 = vld [vmem:[%s335] sm:$0xff]
      %v378 = vld [vmem:[%s335 + $0x8] sm:$0x1]
      %v379 = vld [vmem:[%s335 + $0x10] sm:$0xff]
      %v380 = vld [vmem:[%s335 + $0x18] sm:$0x1]
      %v381 = vld [vmem:[%s335 + $0x20] sm:$0xff]
      %v382 = vld [vmem:[%s335 + $0x28] sm:$0x1]
      %v383 = vld [vmem:[%s335 + $0x30] sm:$0xff]
      %v384 = vld [vmem:[%s335 + $0x38] sm:$0x1]
      %v385 = vld [vmem:[%s335 + $0x40] sm:$0xff]
      %v386 = vld [vmem:[%s335 + $0x48] sm:$0x1]
      %v387 = vld [vmem:[%s335 + $0x50] sm:$0xff]
      %v388 = vld [vmem:[%s335 + $0x58] sm:$0x1]
      %v389 = vld [vmem:[%s335 + $0x60] sm:$0xff]
      %v390 = vld [vmem:[%s335 + $0x68] sm:$0x1]
      %v391 = vld [vmem:[%s335 + $0x70] sm:$0xff]
      %v392 = vld [vmem:[%s335 + $0x78] sm:$0x1]
      %v393 = vld [vmem:[%s340] sm:$0xff]
      %v394 = vld [vmem:[%s340 + $0x10] sm:$0xff]
      %v395 = vld [vmem:[%s340 + $0x20] sm:$0xff]
      %v396 = vld [vmem:[%s340 + $0x30] sm:$0xff]
      %v397 = vld [vmem:[%s340 + $0x40] sm:$0xff]
      %v398 = vld [vmem:[%s340 + $0x50] sm:$0xff]
      %v399 = vld [vmem:[%s340 + $0x60] sm:$0xff]
      %v400 = vld [vmem:[%s340 + $0x70] sm:$0xff]
      %v401 = vld [vmem:[%s4] sm:$0xf]
      %s402 = scalar_lea.vmem %s4, 4
      %v403 = vld [vmem:[%s402] sm:$0xf]
      %vm404 = vcmask 31744
      %v406 = vsel %vm404, %v368, 0
      %v409 = vsel %vm404, %v369, 0
      %v412 = vsel %vm404, %v370, 0
      %v415 = vsel %vm404, %v371, 0
      %v418 = vsel %vm404, %v372, 0
      %v421 = vsel %vm404, %v373, 0
      %v424 = vsel %vm404, %v374, 0
      %v427 = vsel %vm404, %v375, 0
      %vm429 = vcmask 1043456
      %v431 = vsel %vm429, %v403, 0
      %433 = vmatpush.msra.mxu0 0.0
      %434 = vmatpush.msra.mxu0 0.0
      %435 = vmatpush.msra.mxu0 0.0
      %436 = vmatpush.msra.mxu0 0.0
      %437 = vmatpush.msra.mxu0 0.0
      %438 = vmatpush.msra.mxu0 0.0
      %439 = vmatpush.msra.mxu0 0.0
      %440 = vmatpush.msra.mxu0 0.0
      %441 = vmatpush.msra.mxu0 0.0
      %442 = vmatpush.msra.mxu0 0.0
      %443 = vmatpush.msra.mxu0 0.0
      %444 = vmatpush.msra.mxu0 0.0
      %445 = vmatpush.msra.mxu0 0.0
      %446 = vmatpush.msra.mxu0 0.0
      %447 = vmatpush.msra.mxu0 0.0
      %448 = vmatpush.msra.mxu0 %v431
      %449 = vmatmul.f32.gmra.mxu0 %v406
      %v450 = vpop.f32.mrf.mxu0
      %v451 = vadd.f32 0.0, %v450
      %452 = vmatmul.f32.gmra.mxu0 %v409
      %v453 = vpop.f32.mrf.mxu0
      %v454 = vadd.f32 0.0, %v453
      %455 = vmatmul.f32.gmra.mxu0 %v412
      %v456 = vpop.f32.mrf.mxu0
      %v457 = vadd.f32 0.0, %v456
      %458 = vmatmul.f32.gmra.mxu0 %v415
      %v459 = vpop.f32.mrf.mxu0
      %v460 = vadd.f32 0.0, %v459
      %461 = vmatmul.f32.gmra.mxu0 %v418
      %v462 = vpop.f32.mrf.mxu0
      %v463 = vadd.f32 0.0, %v462
      %464 = vmatmul.f32.gmra.mxu0 %v421
      %v465 = vpop.f32.mrf.mxu0
      %v466 = vadd.f32 0.0, %v465
      %467 = vmatmul.f32.gmra.mxu0 %v424
      %v468 = vpop.f32.mrf.mxu0
      %v469 = vadd.f32 0.0, %v468
      %470 = vmatmul.f32.gmra.mxu0 %v427
      %v471 = vpop.f32.mrf.mxu0
      %v472 = vadd.f32 0.0, %v471
      %473 = vdwg.mxu0
      %v475 = vsel %vm404, %v350, 0
      %v478 = vsel %vm404, %v352, 0
      %v481 = vsel %vm404, %v354, 0
      %v484 = vsel %vm404, %v356, 0
      %v487 = vsel %vm404, %v358, 0
      %v490 = vsel %vm404, %v360, 0
      %v493 = vsel %vm404, %v362, 0
      %v496 = vsel %vm404, %v364, 0
      %v499 = vsel %vm429, %v401, 0
      %501 = vmatpush.msra.mxu0 0.0
      %502 = vmatpush.msra.mxu0 0.0
      %503 = vmatpush.msra.mxu0 0.0
      %504 = vmatpush.msra.mxu0 0.0
      %505 = vmatpush.msra.mxu0 0.0
      %506 = vmatpush.msra.mxu0 0.0
      %507 = vmatpush.msra.mxu0 0.0
      %508 = vmatpush.msra.mxu0 0.0
      %509 = vmatpush.msra.mxu0 0.0
      %510 = vmatpush.msra.mxu0 0.0
      %511 = vmatpush.msra.mxu0 0.0
      %512 = vmatpush.msra.mxu0 0.0
      %513 = vmatpush.msra.mxu0 0.0
      %514 = vmatpush.msra.mxu0 0.0
      %515 = vmatpush.msra.mxu0 0.0
      %516 = vmatpush.msra.mxu0 %v499
      %517 = vmatmul.f32.gmra.mxu0 %v475
      %v518 = vpop.f32.mrf.mxu0
      %v519 = vadd.f32 %v451, %v518
      %520 = vmatmul.f32.gmra.mxu0 %v478
      %v521 = vpop.f32.mrf.mxu0
      %v522 = vadd.f32 %v454, %v521
      %523 = vmatmul.f32.gmra.mxu0 %v481
      %v524 = vpop.f32.mrf.mxu0
      %v525 = vadd.f32 %v457, %v524
      %526 = vmatmul.f32.gmra.mxu0 %v484
      %v527 = vpop.f32.mrf.mxu0
      %v528 = vadd.f32 %v460, %v527
      %529 = vmatmul.f32.gmra.mxu0 %v487
      %v530 = vpop.f32.mrf.mxu0
      %v531 = vadd.f32 %v463, %v530
      %532 = vmatmul.f32.gmra.mxu0 %v490
      %v533 = vpop.f32.mrf.mxu0
      %v534 = vadd.f32 %v466, %v533
      %535 = vmatmul.f32.gmra.mxu0 %v493
      %v536 = vpop.f32.mrf.mxu0
      %v537 = vadd.f32 %v469, %v536
      %538 = vmatmul.f32.gmra.mxu0 %v496
      %v539 = vpop.f32.mrf.mxu0
      %v540 = vadd.f32 %v472, %v539
      %541 = vdwg.mxu0
      %vm550 = vcmask 1046528
      %v551 = vrot.slane %v350, 1
      %v552 = vrot.slane %v351, 1
      %v553 = vsel %vm550, %v551, %v552
      %v554 = vrot.slane %v352, 1
      %v555 = vrot.slane %v353, 1
      %v556 = vsel %vm550, %v554, %v555
      %v557 = vrot.slane %v354, 1
      %v558 = vrot.slane %v355, 1
      %v559 = vsel %vm550, %v557, %v558
      %v560 = vrot.slane %v356, 1
      %v561 = vrot.slane %v357, 1
      %v562 = vsel %vm550, %v560, %v561
      %v563 = vrot.slane %v358, 1
      %v564 = vrot.slane %v359, 1
      %v565 = vsel %vm550, %v563, %v564
      %v566 = vrot.slane %v360, 1
      %v567 = vrot.slane %v361, 1
      %v568 = vsel %vm550, %v566, %v567
      %v569 = vrot.slane %v362, 1
      %v570 = vrot.slane %v363, 1
      %v571 = vsel %vm550, %v569, %v570
      %v572 = vrot.slane %v364, 1
      %v573 = vrot.slane %v365, 1
      %v574 = vsel %vm550, %v572, %v573
      %s575 = scalar_lea.vmem %s4, 8
      %v576 = vld [vmem:[%s575] sm:$0xf]
      %v577 = vsel %vm404, %v553, 0
      %v579 = vsel %vm404, %v556, 0
      %v581 = vsel %vm404, %v559, 0
      %v583 = vsel %vm404, %v562, 0
      %v585 = vsel %vm404, %v565, 0
      %v587 = vsel %vm404, %v568, 0
      %v589 = vsel %vm404, %v571, 0
      %v591 = vsel %vm404, %v574, 0
      %v594 = vsel %vm429, %v576, 0
      %596 = vmatpush.msra.mxu0 0.0
      %597 = vmatpush.msra.mxu0 0.0
      %598 = vmatpush.msra.mxu0 0.0
      %599 = vmatpush.msra.mxu0 0.0
      %600 = vmatpush.msra.mxu0 0.0
      %601 = vmatpush.msra.mxu0 0.0
      %602 = vmatpush.msra.mxu0 0.0
      %603 = vmatpush.msra.mxu0 0.0
      %604 = vmatpush.msra.mxu0 0.0
      %605 = vmatpush.msra.mxu0 0.0
      %606 = vmatpush.msra.mxu0 0.0
      %607 = vmatpush.msra.mxu0 0.0
      %608 = vmatpush.msra.mxu0 0.0
      %609 = vmatpush.msra.mxu0 0.0
      %610 = vmatpush.msra.mxu0 0.0
      %611 = vmatpush.msra.mxu0 %v594
      %612 = vmatmul.f32.gmra.mxu0 %v577
      %v613 = vpop.f32.mrf.mxu0
      %v614 = vadd.f32 0.0, %v613
      %615 = vmatmul.f32.gmra.mxu0 %v579
      %v616 = vpop.f32.mrf.mxu0
      %v617 = vadd.f32 0.0, %v616
      %618 = vmatmul.f32.gmra.mxu0 %v581
      %v619 = vpop.f32.mrf.mxu0
      %v620 = vadd.f32 0.0, %v619
      %621 = vmatmul.f32.gmra.mxu0 %v583
      %v622 = vpop.f32.mrf.mxu0
      %v623 = vadd.f32 0.0, %v622
      %624 = vmatmul.f32.gmra.mxu0 %v585
      %v625 = vpop.f32.mrf.mxu0
      %v626 = vadd.f32 0.0, %v625
      %627 = vmatmul.f32.gmra.mxu0 %v587
      %v628 = vpop.f32.mrf.mxu0
      %v629 = vadd.f32 0.0, %v628
      %630 = vmatmul.f32.gmra.mxu0 %v589
      %v631 = vpop.f32.mrf.mxu0
      %v632 = vadd.f32 0.0, %v631
      %633 = vmatmul.f32.gmra.mxu0 %v591
      %v634 = vpop.f32.mrf.mxu0
      %v635 = vadd.f32 0.0, %v634
      %636 = vdwg.mxu0
      %v637 = vadd.f32 %v519, %v614
      %v638 = vadd.f32 %v522, %v617
      %v639 = vadd.f32 %v525, %v620
      %v640 = vadd.f32 %v528, %v623
      %v641 = vadd.f32 %v531, %v626
      %v642 = vadd.f32 %v534, %v629
      %v643 = vadd.f32 %v537, %v632
      %v644 = vadd.f32 %v540, %v635
      %s645 = scalar_lea.vmem %s4, 12
      %v646 = vld [vmem:[%s645] sm:$0xf]
      %v648 = vsel %vm404, %v377, 0
      %v651 = vsel %vm404, %v379, 0
      %v654 = vsel %vm404, %v381, 0
      %v657 = vsel %vm404, %v383, 0
      %v660 = vsel %vm404, %v385, 0
      %v663 = vsel %vm404, %v387, 0
      %v666 = vsel %vm404, %v389, 0
      %v669 = vsel %vm404, %v391, 0
      %v672 = vsel %vm429, %v646, 0
      %674 = vmatpush.msra.mxu0 0.0
      %675 = vmatpush.msra.mxu0 0.0
      %676 = vmatpush.msra.mxu0 0.0
      %677 = vmatpush.msra.mxu0 0.0
      %678 = vmatpush.msra.mxu0 0.0
      %679 = vmatpush.msra.mxu0 0.0
      %680 = vmatpush.msra.mxu0 0.0
      %681 = vmatpush.msra.mxu0 0.0
      %682 = vmatpush.msra.mxu0 0.0
      %683 = vmatpush.msra.mxu0 0.0
      %684 = vmatpush.msra.mxu0 0.0
      %685 = vmatpush.msra.mxu0 0.0
      %686 = vmatpush.msra.mxu0 0.0
      %687 = vmatpush.msra.mxu0 0.0
      %688 = vmatpush.msra.mxu0 0.0
      %689 = vmatpush.msra.mxu0 %v672
      %690 = vmatmul.f32.gmra.mxu0 %v648
      %v691 = vpop.f32.mrf.mxu0
      %v692 = vadd.f32 0.0, %v691
      %693 = vmatmul.f32.gmra.mxu0 %v651
      %v694 = vpop.f32.mrf.mxu0
      %v695 = vadd.f32 0.0, %v694
      %696 = vmatmul.f32.gmra.mxu0 %v654
      %v697 = vpop.f32.mrf.mxu0
      %v698 = vadd.f32 0.0, %v697
      %699 = vmatmul.f32.gmra.mxu0 %v657
      %v700 = vpop.f32.mrf.mxu0
      %v701 = vadd.f32 0.0, %v700
      %702 = vmatmul.f32.gmra.mxu0 %v660
      %v703 = vpop.f32.mrf.mxu0
      %v704 = vadd.f32 0.0, %v703
      %705 = vmatmul.f32.gmra.mxu0 %v663
      %v706 = vpop.f32.mrf.mxu0
      %v707 = vadd.f32 0.0, %v706
      %708 = vmatmul.f32.gmra.mxu0 %v666
      %v709 = vpop.f32.mrf.mxu0
      %v710 = vadd.f32 0.0, %v709
      %711 = vmatmul.f32.gmra.mxu0 %v669
      %v712 = vpop.f32.mrf.mxu0
      %v713 = vadd.f32 0.0, %v712
      %714 = vdwg.mxu0
      %v715 = vadd.f32 %v637, %v692
      %v716 = vadd.f32 %v638, %v695
      %v717 = vadd.f32 %v639, %v698
      %v718 = vadd.f32 %v640, %v701
      %v719 = vadd.f32 %v641, %v704
      %v720 = vadd.f32 %v642, %v707
      %v721 = vadd.f32 %v643, %v710
      %v722 = vadd.f32 %v644, %v713
      %s723 = scalar_lea.vmem %s4, 16
      %v724 = vld [vmem:[%s723] sm:$0xf]
      %v726 = vsel %vm404, %v393, 0
      %v729 = vsel %vm404, %v394, 0
      %v732 = vsel %vm404, %v395, 0
      %v735 = vsel %vm404, %v396, 0
      %v738 = vsel %vm404, %v397, 0
      %v741 = vsel %vm404, %v398, 0
      %v744 = vsel %vm404, %v399, 0
      %v747 = vsel %vm404, %v400, 0
      %v750 = vsel %vm429, %v724, 0
      %752 = vmatpush.msra.mxu0 0.0
      %753 = vmatpush.msra.mxu0 0.0
      %754 = vmatpush.msra.mxu0 0.0
      %755 = vmatpush.msra.mxu0 0.0
      %756 = vmatpush.msra.mxu0 0.0
      %757 = vmatpush.msra.mxu0 0.0
      %758 = vmatpush.msra.mxu0 0.0
      %759 = vmatpush.msra.mxu0 0.0
      %760 = vmatpush.msra.mxu0 0.0
      %761 = vmatpush.msra.mxu0 0.0
      %762 = vmatpush.msra.mxu0 0.0
      %763 = vmatpush.msra.mxu0 0.0
      %764 = vmatpush.msra.mxu0 0.0
      %765 = vmatpush.msra.mxu0 0.0
      %766 = vmatpush.msra.mxu0 0.0
      %767 = vmatpush.msra.mxu0 %v750
      %768 = vmatmul.f32.gmra.mxu0 %v726
      %v769 = vpop.f32.mrf.mxu0
      %v770 = vadd.f32 0.0, %v769
      %771 = vmatmul.f32.gmra.mxu0 %v729
      %v772 = vpop.f32.mrf.mxu0
      %v773 = vadd.f32 0.0, %v772
      %774 = vmatmul.f32.gmra.mxu0 %v732
      %v775 = vpop.f32.mrf.mxu0
      %v776 = vadd.f32 0.0, %v775
      %777 = vmatmul.f32.gmra.mxu0 %v735
      %v778 = vpop.f32.mrf.mxu0
      %v779 = vadd.f32 0.0, %v778
      %780 = vmatmul.f32.gmra.mxu0 %v738
      %v781 = vpop.f32.mrf.mxu0
      %v782 = vadd.f32 0.0, %v781
      %783 = vmatmul.f32.gmra.mxu0 %v741
      %v784 = vpop.f32.mrf.mxu0
      %v785 = vadd.f32 0.0, %v784
      %786 = vmatmul.f32.gmra.mxu0 %v744
      %v787 = vpop.f32.mrf.mxu0
      %v788 = vadd.f32 0.0, %v787
      %789 = vmatmul.f32.gmra.mxu0 %v747
      %v790 = vpop.f32.mrf.mxu0
      %v791 = vadd.f32 0.0, %v790
      %792 = vdwg.mxu0
      %v793 = vadd.f32 %v715, %v770
      %v794 = vadd.f32 %v716, %v773
      %v795 = vadd.f32 %v717, %v776
      %v796 = vadd.f32 %v718, %v779
      %v797 = vadd.f32 %v719, %v782
      %v798 = vadd.f32 %v720, %v785
      %v799 = vadd.f32 %v721, %v788
      %v800 = vadd.f32 %v722, %v791
      %v809 = vrot.slane %v377, 1
      %v810 = vrot.slane %v378, 1
      %v811 = vsel %vm550, %v809, %v810
      %v812 = vrot.slane %v379, 1
      %v813 = vrot.slane %v380, 1
      %v814 = vsel %vm550, %v812, %v813
      %v815 = vrot.slane %v381, 1
      %v816 = vrot.slane %v382, 1
      %v817 = vsel %vm550, %v815, %v816
      %v818 = vrot.slane %v383, 1
      %v819 = vrot.slane %v384, 1
      %v820 = vsel %vm550, %v818, %v819
      %v821 = vrot.slane %v385, 1
      %v822 = vrot.slane %v386, 1
      %v823 = vsel %vm550, %v821, %v822
      %v824 = vrot.slane %v387, 1
      %v825 = vrot.slane %v388, 1
      %v826 = vsel %vm550, %v824, %v825
      %v827 = vrot.slane %v389, 1
      %v828 = vrot.slane %v390, 1
      %v829 = vsel %vm550, %v827, %v828
      %v830 = vrot.slane %v391, 1
      %v831 = vrot.slane %v392, 1
      %v832 = vsel %vm550, %v830, %v831
      %s833 = scalar_lea.vmem %s4, 20
      %v834 = vld [vmem:[%s833] sm:$0xf]
      %v835 = vsel %vm404, %v811, 0
      %v837 = vsel %vm404, %v814, 0
      %v839 = vsel %vm404, %v817, 0
      %v841 = vsel %vm404, %v820, 0
      %v843 = vsel %vm404, %v823, 0
      %v845 = vsel %vm404, %v826, 0
      %v847 = vsel %vm404, %v829, 0
      %v849 = vsel %vm404, %v832, 0
      %v852 = vsel %vm429, %v834, 0
      %854 = vmatpush.msra.mxu0 0.0
      %855 = vmatpush.msra.mxu0 0.0
      %856 = vmatpush.msra.mxu0 0.0
      %857 = vmatpush.msra.mxu0 0.0
      %858 = vmatpush.msra.mxu0 0.0
      %859 = vmatpush.msra.mxu0 0.0
      %860 = vmatpush.msra.mxu0 0.0
      %861 = vmatpush.msra.mxu0 0.0
      %862 = vmatpush.msra.mxu0 0.0
      %863 = vmatpush.msra.mxu0 0.0
      %864 = vmatpush.msra.mxu0 0.0
      %865 = vmatpush.msra.mxu0 0.0
      %866 = vmatpush.msra.mxu0 0.0
      %867 = vmatpush.msra.mxu0 0.0
      %868 = vmatpush.msra.mxu0 0.0
      %869 = vmatpush.msra.mxu0 %v852
      %870 = vmatmul.f32.gmra.mxu0 %v835
      %v871 = vpop.f32.mrf.mxu0
      %v872 = vadd.f32 0.0, %v871
      %873 = vmatmul.f32.gmra.mxu0 %v837
      %v874 = vpop.f32.mrf.mxu0
      %v875 = vadd.f32 0.0, %v874
      %876 = vmatmul.f32.gmra.mxu0 %v839
      %v877 = vpop.f32.mrf.mxu0
      %v878 = vadd.f32 0.0, %v877
      %879 = vmatmul.f32.gmra.mxu0 %v841
      %v880 = vpop.f32.mrf.mxu0
      %v881 = vadd.f32 0.0, %v880
      %882 = vmatmul.f32.gmra.mxu0 %v843
      %v883 = vpop.f32.mrf.mxu0
      %v884 = vadd.f32 0.0, %v883
      %885 = vmatmul.f32.gmra.mxu0 %v845
      %v886 = vpop.f32.mrf.mxu0
      %v887 = vadd.f32 0.0, %v886
      %888 = vmatmul.f32.gmra.mxu0 %v847
      %v889 = vpop.f32.mrf.mxu0
      %v890 = vadd.f32 0.0, %v889
      %891 = vmatmul.f32.gmra.mxu0 %v849
      %v892 = vpop.f32.mrf.mxu0
      %v893 = vadd.f32 0.0, %v892
      %894 = vdwg.mxu0
      %v895 = vadd.f32 %v793, %v872
      %v896 = vadd.f32 %v794, %v875
      %v897 = vadd.f32 %v795, %v878
      %v898 = vadd.f32 %v796, %v881
      %v899 = vadd.f32 %v797, %v884
      %v900 = vadd.f32 %v798, %v887
      %v901 = vadd.f32 %v799, %v890
      %v902 = vadd.f32 %v800, %v893
      %s903 = scalar_lea.vmem %s4, 24
      %v904 = vld [vmem:[%s903] sm:$0xf]
      %v906 = vsel %vm404, %v366, 0
      %v909 = vsel %vm429, %v904, 0
      %911 = vmatpush.msra.mxu0 0.0
      %912 = vmatpush.msra.mxu0 0.0
      %913 = vmatpush.msra.mxu0 0.0
      %914 = vmatpush.msra.mxu0 0.0
      %915 = vmatpush.msra.mxu0 0.0
      %916 = vmatpush.msra.mxu0 0.0
      %917 = vmatpush.msra.mxu0 0.0
      %918 = vmatpush.msra.mxu0 0.0
      %919 = vmatpush.msra.mxu0 0.0
      %920 = vmatpush.msra.mxu0 0.0
      %921 = vmatpush.msra.mxu0 0.0
      %922 = vmatpush.msra.mxu0 0.0
      %923 = vmatpush.msra.mxu0 0.0
      %924 = vmatpush.msra.mxu0 0.0
      %925 = vmatpush.msra.mxu0 0.0
      %926 = vmatpush.msra.mxu0 %v909
      %927 = vmatmul.f32.gmra.mxu0 %v478
      %v928 = vpop.f32.mrf.mxu0
      %v929 = vadd.f32 0.0, %v928
      %930 = vmatmul.f32.gmra.mxu0 %v481
      %v931 = vpop.f32.mrf.mxu0
      %v932 = vadd.f32 0.0, %v931
      %933 = vmatmul.f32.gmra.mxu0 %v484
      %v934 = vpop.f32.mrf.mxu0
      %v935 = vadd.f32 0.0, %v934
      %936 = vmatmul.f32.gmra.mxu0 %v487
      %v937 = vpop.f32.mrf.mxu0
      %v938 = vadd.f32 0.0, %v937
      %939 = vmatmul.f32.gmra.mxu0 %v490
      %v940 = vpop.f32.mrf.mxu0
      %v941 = vadd.f32 0.0, %v940
      %942 = vmatmul.f32.gmra.mxu0 %v493
      %v943 = vpop.f32.mrf.mxu0
      %v944 = vadd.f32 0.0, %v943
      %945 = vmatmul.f32.gmra.mxu0 %v496
      %v946 = vpop.f32.mrf.mxu0
      %v947 = vadd.f32 0.0, %v946
      %948 = vmatmul.f32.gmra.mxu0 %v906
      %v949 = vpop.f32.mrf.mxu0
      %v950 = vadd.f32 0.0, %v949
      %951 = vdwg.mxu0
      %v952 = vadd.f32 %v895, %v929
      %v953 = vadd.f32 %v896, %v932
      %v954 = vadd.f32 %v897, %v935
      %v955 = vadd.f32 %v898, %v938
      %v956 = vadd.f32 %v899, %v941
      %v957 = vadd.f32 %v900, %v944
      %v958 = vadd.f32 %v901, %v947
      %v959 = vadd.f32 %v902, %v950
      %s960 = scalar_lea.vmem %s4, 28
      %v961 = vld [vmem:[%s960] sm:$0xf]
      %v963 = vsel %vm404, %v376, 0
      %v966 = vsel %vm429, %v961, 0
      %968 = vmatpush.msra.mxu0 0.0
      %969 = vmatpush.msra.mxu0 0.0
      %970 = vmatpush.msra.mxu0 0.0
      %971 = vmatpush.msra.mxu0 0.0
      %972 = vmatpush.msra.mxu0 0.0
      %973 = vmatpush.msra.mxu0 0.0
      %974 = vmatpush.msra.mxu0 0.0
      %975 = vmatpush.msra.mxu0 0.0
      %976 = vmatpush.msra.mxu0 0.0
      %977 = vmatpush.msra.mxu0 0.0
      %978 = vmatpush.msra.mxu0 0.0
      %979 = vmatpush.msra.mxu0 0.0
      %980 = vmatpush.msra.mxu0 0.0
      %981 = vmatpush.msra.mxu0 0.0
      %982 = vmatpush.msra.mxu0 0.0
      %983 = vmatpush.msra.mxu0 %v966
      %984 = vmatmul.f32.gmra.mxu0 %v409
      %v985 = vpop.f32.mrf.mxu0
      %v986 = vadd.f32 0.0, %v985
      %987 = vmatmul.f32.gmra.mxu0 %v412
      %v988 = vpop.f32.mrf.mxu0
      %v989 = vadd.f32 0.0, %v988
      %990 = vmatmul.f32.gmra.mxu0 %v415
      %v991 = vpop.f32.mrf.mxu0
      %v992 = vadd.f32 0.0, %v991
      %993 = vmatmul.f32.gmra.mxu0 %v418
      %v994 = vpop.f32.mrf.mxu0
      %v995 = vadd.f32 0.0, %v994
      %996 = vmatmul.f32.gmra.mxu0 %v421
      %v997 = vpop.f32.mrf.mxu0
      %v998 = vadd.f32 0.0, %v997
      %999 = vmatmul.f32.gmra.mxu0 %v424
      %v1000 = vpop.f32.mrf.mxu0
      %v1001 = vadd.f32 0.0, %v1000
      %1002 = vmatmul.f32.gmra.mxu0 %v427
      %v1003 = vpop.f32.mrf.mxu0
      %v1004 = vadd.f32 0.0, %v1003
      %1005 = vmatmul.f32.gmra.mxu0 %v963
      %v1006 = vpop.f32.mrf.mxu0
      %v1007 = vadd.f32 0.0, %v1006
      %1008 = vdwg.mxu0
      %v1009 = vadd.f32 %v952, %v986
      %v1010 = vadd.f32 %v953, %v989
      %v1011 = vadd.f32 %v954, %v992
      %v1012 = vadd.f32 %v955, %v995
      %v1013 = vadd.f32 %v956, %v998
      %v1014 = vadd.f32 %v957, %v1001
      %v1015 = vadd.f32 %v958, %v1004
      %v1016 = vadd.f32 %v959, %v1007
      %v1018 = vrot.slane %v366, 1
      %v1019 = vrot.slane %v367, 1
      %v1020 = vsel %vm550, %v1018, %v1019
      %s1021 = scalar_lea.vmem %s4, 32
      %v1022 = vld [vmem:[%s1021] sm:$0xf]
      %v1023 = vsel %vm404, %v1020, 0
      %v1026 = vsel %vm429, %v1022, 0
      %1028 = vmatpush.msra.mxu0 0.0
      %1029 = vmatpush.msra.mxu0 0.0
      %1030 = vmatpush.msra.mxu0 0.0
      %1031 = vmatpush.msra.mxu0 0.0
      %1032 = vmatpush.msra.mxu0 0.0
      %1033 = vmatpush.msra.mxu0 0.0
      %1034 = vmatpush.msra.mxu0 0.0
      %1035 = vmatpush.msra.mxu0 0.0
      %1036 = vmatpush.msra.mxu0 0.0
      %1037 = vmatpush.msra.mxu0 0.0
      %1038 = vmatpush.msra.mxu0 0.0
      %1039 = vmatpush.msra.mxu0 0.0
      %1040 = vmatpush.msra.mxu0 0.0
      %1041 = vmatpush.msra.mxu0 0.0
      %1042 = vmatpush.msra.mxu0 0.0
      %1043 = vmatpush.msra.mxu0 %v1026
      %1044 = vmatmul.f32.gmra.mxu0 %v579
      %v1045 = vpop.f32.mrf.mxu0
      %v1046 = vadd.f32 0.0, %v1045
      %1047 = vmatmul.f32.gmra.mxu0 %v581
      %v1048 = vpop.f32.mrf.mxu0
      %v1049 = vadd.f32 0.0, %v1048
      %1050 = vmatmul.f32.gmra.mxu0 %v583
      %v1051 = vpop.f32.mrf.mxu0
      %v1052 = vadd.f32 0.0, %v1051
      %1053 = vmatmul.f32.gmra.mxu0 %v585
      %v1054 = vpop.f32.mrf.mxu0
      %v1055 = vadd.f32 0.0, %v1054
      %1056 = vmatmul.f32.gmra.mxu0 %v587
      %v1057 = vpop.f32.mrf.mxu0
      %v1058 = vadd.f32 0.0, %v1057
      %1059 = vmatmul.f32.gmra.mxu0 %v589
      %v1060 = vpop.f32.mrf.mxu0
      %v1061 = vadd.f32 0.0, %v1060
      %1062 = vmatmul.f32.gmra.mxu0 %v591
      %v1063 = vpop.f32.mrf.mxu0
      %v1064 = vadd.f32 0.0, %v1063
      %1065 = vmatmul.f32.gmra.mxu0 %v1023
      %v1066 = vpop.f32.mrf.mxu0
      %v1067 = vadd.f32 0.0, %v1066
      %1068 = vdwg.mxu0
      %v1069 = vadd.f32 %v1009, %v1046
      %v1070 = vadd.f32 %v1010, %v1049
      %v1071 = vadd.f32 %v1011, %v1052
      %v1072 = vadd.f32 %v1012, %v1055
      %v1073 = vadd.f32 %v1013, %v1058
      %v1074 = vadd.f32 %v1014, %v1061
      %v1075 = vadd.f32 %v1015, %v1064
      %v1076 = vadd.f32 %v1016, %v1067
      %v1077 = vld [vmem:[%s5] sm:$0x1]
      %v1079 = vperm.slane %v1077, 0
      %v1081 = vadd.f32 %v1069, %v1079
      %v1082 = vadd.f32 %v1070, %v1079
      %v1083 = vadd.f32 %v1071, %v1079
      %v1084 = vadd.f32 %v1072, %v1079
      %v1085 = vadd.f32 %v1073, %v1079
      %v1086 = vadd.f32 %v1074, %v1079
      %v1087 = vadd.f32 %v1075, %v1079
      %v1088 = vadd.f32 %v1076, %v1079
      %1089 = vst [vmem:[%s345] sm:$0xff] %v1081
      %1090 = vst [vmem:[%s345 + $0x8] sm:$0xff] %v1082
      %1091 = vst [vmem:[%s345 + $0x10] sm:$0xff] %v1083
      %1092 = vst [vmem:[%s345 + $0x18] sm:$0xff] %v1084
      %1093 = vst [vmem:[%s345 + $0x20] sm:$0xff] %v1085
      %1094 = vst [vmem:[%s345 + $0x28] sm:$0xff] %v1086
      %1095 = vst [vmem:[%s345 + $0x30] sm:$0xff] %v1087
      %1096 = vst [vmem:[%s345 + $0x38] sm:$0xff] %v1088
      %v1097 = vadd.f32 %v1081, %v1082
      %v1098 = vadd.f32 %v1097, %v1083
      %v1099 = vadd.f32 %v1098, %v1084
      %v1100 = vadd.f32 %v1099, %v1085
      %v1101 = vadd.f32 %v1100, %v1086
      %v1102 = vadd.f32 %v1101, %v1087
      %v1103 = vadd.f32 %v1102, %v1088
      %v1104 = vrot.slane %v1103, 4
      %v1105 = vadd.f32 %v1103, %v1104
      %v1106 = vrot.slane %v1105, 2
      %v1107 = vadd.f32 %v1105, %v1106
      %v1108 = vrot.slane %v1107, 1
      %v1109 = vadd.f32 %v1107, %v1108
      %v1110 = vmul.f32 %v1081, %v1081
      %v1111 = vmul.f32 %v1082, %v1082
      %v1112 = vmul.f32 %v1083, %v1083
      %v1113 = vmul.f32 %v1084, %v1084
      %v1114 = vmul.f32 %v1085, %v1085
      %v1115 = vmul.f32 %v1086, %v1086
      %v1116 = vmul.f32 %v1087, %v1087
      %v1117 = vmul.f32 %v1088, %v1088
      %v1118 = vadd.f32 %v1110, %v1111
      %v1119 = vadd.f32 %v1118, %v1112
      %v1120 = vadd.f32 %v1119, %v1113
      %v1121 = vadd.f32 %v1120, %v1114
      %v1122 = vadd.f32 %v1121, %v1115
      %v1123 = vadd.f32 %v1122, %v1116
      %v1124 = vadd.f32 %v1123, %v1117
      %v1125 = vrot.slane %v1124, 4
      %v1126 = vadd.f32 %v1124, %v1125
      %v1127 = vrot.slane %v1126, 2
      %v1128 = vadd.f32 %v1126, %v1127
      %v1129 = vrot.slane %v1128, 1
      %v1130 = vadd.f32 %v1128, %v1129
      %vm1131 = vcmask 1040384
      %v1132 = vsel %vm1131, %v1109, %v1130
      %1133 = vst [vmem:[%s349] sm:$0x3] %v1132
      %p1134 = scmp.lt.s32.totalorder %s19, 1
      %s1135 = scalar_select %p1134, %s19, 1
      %s1136 = smul.addr %s1135, 8
      %s1137 = smul.addr %s1136, 8
      %s1138 = scalar_lea.vmem %s6, %s1137
      %p1139 = scmp.lt.s32.totalorder %s19, 1
      %s1140 = scalar_select %p1139, %s19, 1
      %s1141 = smul.addr %s1140, 2
      %s1142 = scalar_lea.vmem %s7, %s1141
      // Predicated region
      $region45: #{downsample.1} parent=43 // pred_check
        %p1143 = pneg %p183
      $region46: #{downsample.1} parent=43 // pred_check_branch
        %1145 = sbr.rel (%p1143) target = $region48
      $region47: #{downsample.1} parent=43 // pred_region
        _
      $region48: #{downsample.1} parent=43 // pred_fallthru
        _
      // Predicated region
      $region49: #{downsample.1} parent=43 // pred_check
        %p1146 = pneg %p209
      $region50: #{downsample.1} parent=43 // pred_check_branch
        %1148 = sbr.rel (%p1146) target = $region52
      $region51: #{downsample.1} parent=43 // pred_region
        _
      $region52: #{downsample.1} parent=43 // pred_fallthru
        _
    $region44: #{downsample.1} parent=5 // pred_fallthru
      _
    %p1149 = scmp.le.s32.totalorder 2, %s14
    // Predicated region
    $region53: #{downsample.1} parent=5 // pred_check
      %p1150 = pneg %p1149
    $region54: #{downsample.1} parent=5 // pred_check_branch
      %1152 = sbr.rel (%p1150) target = $region56
    $region55: #{downsample.1} parent=5 // pred_region
      %s1153 = ssub.s32 %s14, 2
      // Predicated region
      $region57: #{downsample.1} parent=55 // pred_check
        %p1154 = pneg %p189
      $region58: #{downsample.1} parent=55 // pred_check_branch
        %1156 = sbr.rel (%p1154) target = $region60
      $region59: #{downsample.1} parent=55 // pred_region
        %p1157 = scmp.lt.s32.totalorder %s20, 1
        %s1158 = scalar_select %p1157, %s20, 1
        %s1159 = smul.addr %s1158, 8
        %s1160 = smul.addr %s1159, 8
        %s1161 = scalar_lea.vmem %s6, %s1160
      $region60: #{downsample.1} parent=55 // pred_fallthru
        _
      // Predicated region
      $region61: #{downsample.1} parent=55 // pred_check
        %p1162 = pneg %p215
      $region62: #{downsample.1} parent=55 // pred_check_branch
        %1164 = sbr.rel (%p1162) target = $region64
      $region63: #{downsample.1} parent=55 // pred_region
        %p1165 = scmp.lt.s32.totalorder %s20, 1
        %s1166 = scalar_select %p1165, %s20, 1
        %s1167 = smul.addr %s1166, 2
        %s1168 = scalar_lea.vmem %s7, %s1167
      $region64: #{downsample.1} parent=55 // pred_fallthru
        _
    $region56: #{downsample.1} parent=5 // pred_fallthru
      _
  $region6: #{downsample.1} parent=0 // loop_footer
    %s18 = sadd.s32 1, %s14
  $region7: #{downsample.1} parent=0 // loop_footer_branch
    %13 = sbr.rel target = $region3
  $region8: #{downsample.1} parent=0 // loop_exit
    _

</llo_original>
